<compile_context>
chip_gen: v7x
topology: tpu7x:2x2x1
jax: 0.10.0
libtpu: 0.0.40
codegen_flags: <defaults>
</compile_context>

<pallas_src>
import jax
import jax.numpy as jnp
from jax.experimental import pallas as pl
from jax.experimental.pallas import tpu as pltpu

N_NODES = 16   # graph nodes ("batch" dim for the GRU)
T_IN    = 8    # input feature length per node
HIDDEN  = 32   # hidden size
N_EDGES = 40


# --------------------------------------------------------------------------- #
# Kernel: one graph per grid step.
#   x_ref   [N, T_IN]      node features
#   a_ref   [N, N]         dense normalized adjacency
#   wc_ref  [T_IN, 3H]     folded weight  W_gcn @ W_ih
#   aux_ref [4, 3H]        row0 = b_comb, row1 = b_hh, row2[:H] = w_fc, row3[0] = b_fc
#   out_ref [N, 1]
# --------------------------------------------------------------------------- #
def gcn_gru_kernel(x_ref, a_ref, wc_ref, aux_ref, out_ref):
    h3 = aux_ref.shape[-1]
    H = h3 // 3

    x = x_ref[...]                                                    # [N, T_IN]

    # Folded GCNConv + GRU input projection:
    #   gi = A_norm @ (X @ W_comb) + b_comb        (2 MXU matmuls in the chain)
    xw = jnp.dot(x, wc_ref[...], preferred_element_type=jnp.float32)  # [N, 3H]
    gi = jnp.dot(a_ref[...], xw, preferred_element_type=jnp.float32)  # [N, 3H]
    gi = gi + aux_ref[0:1, :]                                          # + b_comb

    # GRU cell, single step, h0 = 0 (PyTorch gate order r | z | n).
    # W_hh @ h0 vanishes, but hidden biases remain; b_hn is gated by r as in torch.
    bh = aux_ref[1:2, :]                                               # b_hh [1, 3H]
    i_r, i_z, i_n = gi[:, 0:H], gi[:, H:2 * H], gi[:, 2 * H:3 * H]
    h_r, h_z, h_n = bh[:, 0:H], bh[:, H:2 * H], bh[:, 2 * H:3 * H]

    r = jax.nn.sigmoid(i_r + h_r)
    z = jax.nn.sigmoid(i_z + h_z)
    n = jnp.tanh(i_n + r * h_n)
    h = (1.0 - z) * n                                                  # + z*h0, h0=0

    # fc: Linear(hidden, 1) as VPU multiply + lane reduce (w_fc lives in aux slab).
    wfc = aux_ref[2:3, 0:H]                                            # [1, H]
    bfc = aux_ref[3:4, 0:1]                                            # [1, 1]
    out_ref[...] = jnp.sum(h * wfc, axis=-1, keepdims=True) + bfc      # [N, 1]


# --------------------------------------------------------------------------- #
# One-time setup helpers (run outside the per-call hot path).
# --------------------------------------------------------------------------- #
def build_normalized_adjacency(edge_idx, num_nodes):
    """Dense D^-1/2 (A + I) D^-1/2 matching PyG GCNConv's gcn_norm. Build ONCE."""
    src = edge_idx[0]
    dst = edge_idx[1]
    loop = jnp.arange(num_nodes, dtype=edge_idx.dtype)
    src = jnp.concatenate([src, loop])
    dst = jnp.concatenate([dst, loop])
    deg = jnp.zeros((num_nodes,), jnp.float32).at[dst].add(1.0)
    dinv = jnp.where(deg > 0.0, jax.lax.rsqrt(deg), 0.0)
    norm = dinv[src] * dinv[dst]
    a = jnp.zeros((num_nodes, num_nodes), jnp.float32).at[dst, src].add(norm)
    return a  # out[i] = sum_j a[i, j] * msg[j]


def pack_params(params):
    """Fold W_gcn into W_ih and pack all small tensors into one aux slab."""
    w_comb = (params["w_gcn"] @ params["w_ih"]).astype(jnp.float32)        # [T_IN, 3H]
    b_comb = params["b_gcn"] @ params["w_ih"] + params["b_ih"]             # [1, 3H]
    H = params["w_ih"].shape[0]
    aux = jnp.zeros((4, 3 * H), jnp.float32)
    aux = aux.at[0, :].set(b_comb[0])
    aux = aux.at[1, :].set(params["b_hh"][0])
    aux = aux.at[2, :H].set(params["w_fc"][:, 0])
    aux = aux.at[3, 0].set(params["b_fc"][0, 0])
    return w_comb, aux


# --------------------------------------------------------------------------- #
# Forward wrappers.
# --------------------------------------------------------------------------- #
def gcn_gru_forward_batched(x_b, a_b, w_comb, aux):
    """B graphs per pallas_call; grid axis is 'parallel' (v7x megacore)."""
    B, N, t_in = x_b.shape
    h3 = w_comb.shape[1]
    out = pl.pallas_call(
        gcn_gru_kernel,
        out_shape=jax.ShapeDtypeStruct((B, N, 1), jnp.float32),
        grid=(B,),
        in_specs=[
            pl.BlockSpec((pl.Squeezed(), N, t_in), lambda b: (b, 0, 0)),
            pl.BlockSpec((pl.Squeezed(), N, N), lambda b: (b, 0, 0)),
            pl.BlockSpec((w_comb.shape[0], h3), lambda b: (0, 0)),
            pl.BlockSpec((aux.shape[0], h3), lambda b: (0, 0)),
        ],
        out_specs=pl.BlockSpec((pl.Squeezed(), N, 1), lambda b: (b, 0, 0)),
        compiler_params=pltpu.CompilerParams(
            dimension_semantics=("parallel",)),
    )(x_b, a_b, w_comb, aux)
    return jnp.squeeze(out, axis=-1)   # [B, N]


def gcn_gru_forward(x_seq, a_norm, w_comb, aux):
    """Single-graph forward matching the PyTorch module's semantics -> [N]."""
    return gcn_gru_forward_batched(x_seq[None], a_norm[None], w_comb, aux)[0]


# --------------------------------------------------------------------------- #
# Pure-JAX reference of the UNFOLDED original math (correctness check).
# --------------------------------------------------------------------------- #
def gcn_gru_ref(x_seq, a_norm, params):
    H = params["w_ih"].shape[0]
    g = a_norm @ (x_seq @ params["w_gcn"]) + params["b_gcn"]
    gi = g @ params["w_ih"] + params["b_ih"]
    bh = params["b_hh"]
    i_r, i_z, i_n = gi[:, 0:H], gi[:, H:2 * H], gi[:, 2 * H:3 * H]
    h_r, h_z, h_n = bh[:, 0:H], bh[:, H:2 * H], bh[:, 2 * H:3 * H]
    r = jax.nn.sigmoid(i_r + h_r)
    z = jax.nn.sigmoid(i_z + h_z)
    n = jnp.tanh(i_n + r * h_n)
    h = (1.0 - z) * n
    return (h @ params["w_fc"] + params["b_fc"])[:, 0]


def init_params(key, t_in, hidden):
    ks = jax.random.split(key, 8)
    scale = 0.1
    return {
        # GCNConv: X @ W_gcn (stored transposed, [t_in, hidden]) + bias
        "w_gcn": scale * jax.random.normal(ks[0], (t_in, hidden), jnp.float32),
        "b_gcn": scale * jax.random.normal(ks[1], (1, hidden), jnp.float32),
        # GRU: weight_ih_l0^T -> [hidden, 3*hidden], biases [1, 3*hidden]
        "w_ih": scale * jax.random.normal(ks[2], (hidden, 3 * hidden), jnp.float32),
        "b_ih": scale * jax.random.normal(ks[3], (1, 3 * hidden), jnp.float32),
        "b_hh": scale * jax.random.normal(ks[4], (1, 3 * hidden), jnp.float32),
        # weight_hh_l0 unused at runtime (seq_len == 1, h0 == 0).
        # fc: Linear(hidden, 1) stored transposed -> [hidden, 1]
        "w_fc": scale * jax.random.normal(ks[5], (hidden, 1), jnp.float32),
        "b_fc": scale * jax.random.normal(ks[6], (1, 1), jnp.float32),
    }


if __name__ == "__main__":
    key = jax.random.PRNGKey(0)
    k_x, k_e, k_p, k_b = jax.random.split(key, 4)

    x_seq = jax.random.normal(k_x, (N_NODES, T_IN), jnp.float32)
    edge_idx = jax.random.randint(k_e, (2, N_EDGES), 0, N_NODES, jnp.int32)
    params = init_params(k_p, T_IN, HIDDEN)

    # One-time setup: adjacency scatter + weight folding/packing (cached).
    a_norm = jax.block_until_ready(build_normalized_adjacency(edge_idx, N_NODES))
    w_comb, aux = pack_params(params)

    # Single-graph forward (original module semantics).
    fwd = jax.jit(gcn_gru_forward)
    y = fwd(x_seq, a_norm, w_comb, aux)
    jax.block_until_ready(y)
    assert y.shape == (N_NODES,), y.shape

    # Check the folded kernel against the unfolded pure-JAX reference.
    y_ref = gcn_gru_ref(x_seq, a_norm, params)
    assert jnp.allclose(y, y_ref, atol=1e-4, rtol=1e-4), float(
        jnp.max(jnp.abs(y - y_ref)))

    # Batched path: several graphs per pallas_call (parallel grid axis).
    B = 4
    x_b = jax.random.normal(k_b, (B, N_NODES, T_IN), jnp.float32)
    a_b = jnp.broadcast_to(a_norm, (B, N_NODES, N_NODES))
    fwd_b = jax.jit(gcn_gru_forward_batched)
    y_b = fwd_b(x_b, a_b, w_comb, aux)
    jax.block_until_ready(y_b)
    assert y_b.shape == (B, N_NODES), y_b.shape

    print("KERNEL_OK")
</pallas_src>

<mosaic_0001>
module attributes {stable_mosaic.version = 11 : i64} {
  func.func @gcn_gru_kernel(%arg0: i32, %arg1: memref<1x16x8xf32, #tpu.memory_space<vmem>>, %arg2: memref<1x16x16xf32, #tpu.memory_space<vmem>>, %arg3: memref<8x96xf32, #tpu.memory_space<vmem>>, %arg4: memref<4x96xf32, #tpu.memory_space<vmem>>, %arg5: memref<1x16x1xf32, #tpu.memory_space<vmem>>) attributes {dimension_semantics = [#tpu.dimension_semantics<parallel>], iteration_bounds = array<i64: 1>, scalar_prefetch = 0 : i64, scratch_operands = 0 : i64, tpu.core_type = #tpu.core_type<tc>, window_params = [{transform_indices = @transform_0, window_bounds = array<i64: 1, 16, 8>}, {transform_indices = @transform_1, window_bounds = array<i64: 1, 16, 16>}, {pipeline_mode = #tpu.pipeline_mode<synchronous>, transform_indices = @transform_2, window_bounds = array<i64: 8, 96>}, {pipeline_mode = #tpu.pipeline_mode<synchronous>, transform_indices = @transform_3, window_bounds = array<i64: 4, 96>}, {transform_indices = @transform_4, window_bounds = array<i64: 1, 16, 1>}]} {
    %c0 = arith.constant 0 : index
    %c0_0 = arith.constant 0 : index
    %c0_1 = arith.constant 0 : index
    %0 = vector.load %arg1[%c0, %c0_0, %c0_1] : memref<1x16x8xf32, #tpu.memory_space<vmem>>, vector<1x16x8xf32>
    %1 = vector.shape_cast %0 : vector<1x16x8xf32> to vector<16x8xf32>
    %c0_2 = arith.constant 0 : index
    %c0_3 = arith.constant 0 : index
    %2 = vector.load %arg3[%c0_2, %c0_3] : memref<8x96xf32, #tpu.memory_space<vmem>>, vector<8x96xf32>
    %cst = arith.constant dense<0.000000e+00> : vector<16x96xf32>
    %3 = tpu.matmul %1, %2, %cst {dimension_numbers = #tpu.dot_dimension_numbers<[1], [0], [0], [1], [0, 0, 1, 1], [], []>} : vector<16x8xf32>, vector<8x96xf32>, vector<16x96xf32> -> vector<16x96xf32>
    %c0_4 = arith.constant 0 : index
    %c0_5 = arith.constant 0 : index
    %c0_6 = arith.constant 0 : index
    %4 = vector.load %arg2[%c0_4, %c0_5, %c0_6] : memref<1x16x16xf32, #tpu.memory_space<vmem>>, vector<1x16x16xf32>
    %5 = vector.shape_cast %4 : vector<1x16x16xf32> to vector<16x16xf32>
    %cst_7 = arith.constant dense<0.000000e+00> : vector<16x96xf32>
    %6 = tpu.matmul %5, %3, %cst_7 {dimension_numbers = #tpu.dot_dimension_numbers<[1], [0], [0], [1], [0, 0, 1, 1], [], []>} : vector<16x16xf32>, vector<16x96xf32>, vector<16x96xf32> -> vector<16x96xf32>
    %c0_8 = arith.constant 0 : index
    %c0_9 = arith.constant 0 : index
    %7 = vector.load %arg4[%c0_8, %c0_9] : memref<4x96xf32, #tpu.memory_space<vmem>>, vector<1x96xf32>
    %8 = vector.broadcast %7 : vector<1x96xf32> to vector<16x96xf32>
    %9 = arith.addf %6, %8 : vector<16x96xf32>
    %c1 = arith.constant 1 : index
    %c0_10 = arith.constant 0 : index
    %10 = vector.load %arg4[%c1, %c0_10] : memref<4x96xf32, #tpu.memory_space<vmem>>, vector<1x96xf32>
    %11 = vector.extract_strided_slice %9 {offsets = [0, 0], sizes = [16, 32], strides = [1, 1]} : vector<16x96xf32> to vector<16x32xf32>
    %12 = vector.extract_strided_slice %9 {offsets = [0, 32], sizes = [16, 32], strides = [1, 1]} : vector<16x96xf32> to vector<16x32xf32>
    %13 = vector.extract_strided_slice %9 {offsets = [0, 64], sizes = [16, 32], strides = [1, 1]} : vector<16x96xf32> to vector<16x32xf32>
    %14 = vector.extract_strided_slice %10 {offsets = [0, 0], sizes = [1, 32], strides = [1, 1]} : vector<1x96xf32> to vector<1x32xf32>
    %15 = vector.extract_strided_slice %10 {offsets = [0, 32], sizes = [1, 32], strides = [1, 1]} : vector<1x96xf32> to vector<1x32xf32>
    %16 = vector.extract_strided_slice %10 {offsets = [0, 64], sizes = [1, 32], strides = [1, 1]} : vector<1x96xf32> to vector<1x32xf32>
    %17 = vector.broadcast %14 : vector<1x32xf32> to vector<16x32xf32>
    %18 = arith.addf %11, %17 : vector<16x32xf32>
    %19 = arith.negf %18 : vector<16x32xf32>
    %20 = math.exp %19 : vector<16x32xf32>
    %cst_11 = arith.constant 1.000000e+00 : f32
    %21 = vector.broadcast %cst_11 : f32 to vector<16x32xf32>
    %22 = arith.addf %21, %20 : vector<16x32xf32>
    %23 = arith.divf %21, %22 : vector<16x32xf32>
    %24 = vector.broadcast %15 : vector<1x32xf32> to vector<16x32xf32>
    %25 = arith.addf %12, %24 : vector<16x32xf32>
    %26 = arith.negf %25 : vector<16x32xf32>
    %27 = math.exp %26 : vector<16x32xf32>
    %cst_12 = arith.constant 1.000000e+00 : f32
    %28 = vector.broadcast %cst_12 : f32 to vector<16x32xf32>
    %29 = arith.addf %28, %27 : vector<16x32xf32>
    %30 = arith.divf %28, %29 : vector<16x32xf32>
    %31 = vector.broadcast %16 : vector<1x32xf32> to vector<16x32xf32>
    %32 = arith.mulf %23, %31 : vector<16x32xf32>
    %33 = arith.addf %13, %32 : vector<16x32xf32>
    %34 = math.tanh %33 : vector<16x32xf32>
    %cst_13 = arith.constant 1.000000e+00 : f32
    %35 = vector.broadcast %cst_13 : f32 to vector<16x32xf32>
    %36 = arith.subf %35, %30 : vector<16x32xf32>
    %37 = arith.mulf %36, %34 : vector<16x32xf32>
    %c2 = arith.constant 2 : index
    %c0_14 = arith.constant 0 : index
    %38 = vector.load %arg4[%c2, %c0_14] : memref<4x96xf32, #tpu.memory_space<vmem>>, vector<1x32xf32>
    %c3 = arith.constant 3 : index
    %c0_15 = arith.constant 0 : index
    %39 = vector.load %arg4[%c3, %c0_15] : memref<4x96xf32, #tpu.memory_space<vmem>>, vector<1x1xf32>
    %40 = vector.broadcast %38 : vector<1x32xf32> to vector<16x32xf32>
    %41 = arith.mulf %37, %40 : vector<16x32xf32>
    %cst_16 = arith.constant dense<0.000000e+00> : vector<16xf32>
    %42 = vector.multi_reduction <add>, %41, %cst_16 [1] : vector<16x32xf32> to vector<16xf32>
    %43 = vector.shape_cast %42 : vector<16xf32> to vector<16x1xf32>
    %44 = vector.broadcast %39 : vector<1x1xf32> to vector<16x1xf32>
    %45 = arith.addf %43, %44 : vector<16x1xf32>
    %c0_17 = arith.constant 0 : index
    %c0_18 = arith.constant 0 : index
    %c0_19 = arith.constant 0 : index
    %46 = vector.load %arg5[%c0_17, %c0_18, %c0_19] : memref<1x16x1xf32, #tpu.memory_space<vmem>>, vector<1x16x1xf32>
    %47 = vector.shape_cast %46 : vector<1x16x1xf32> to vector<16x1xf32>
    %48 = vector.shape_cast %45 : vector<16x1xf32> to vector<1x16x1xf32>
    tpu.vector_store %arg5[%c0_17, %c0_18, %c0_19], %48 {strides = array<i32>} : memref<1x16x1xf32, #tpu.memory_space<vmem>>, vector<1x16x1xf32>,
    return
  }
  func.func @transform_0(%arg0: i32) -> (i32, i32, i32) {
    %c0_i32 = arith.constant 0 : i32
    %c0_i32_0 = arith.constant 0 : i32
    %c0_i32_1 = arith.constant 0 : i32
    return %arg0, %c0_i32, %c0_i32_0 : i32, i32, i32
  }
  func.func @transform_1(%arg0: i32) -> (i32, i32, i32) {
    %c0_i32 = arith.constant 0 : i32
    %c0_i32_0 = arith.constant 0 : i32
    %c0_i32_1 = arith.constant 0 : i32
    return %arg0, %c0_i32, %c0_i32_0 : i32, i32, i32
  }
  func.func @transform_2(%arg0: i32) -> (i32, i32) {
    %c0_i32 = arith.constant 0 : i32
    %c0_i32_0 = arith.constant 0 : i32
    %c0_i32_1 = arith.constant 0 : i32
    return %c0_i32, %c0_i32_0 : i32, i32
  }
  func.func @transform_3(%arg0: i32) -> (i32, i32) {
    %c0_i32 = arith.constant 0 : i32
    %c0_i32_0 = arith.constant 0 : i32
    %c0_i32_1 = arith.constant 0 : i32
    return %c0_i32, %c0_i32_0 : i32, i32
  }
  func.func @transform_4(%arg0: i32) -> (i32, i32, i32) {
    %c0_i32 = arith.constant 0 : i32
    %c0_i32_0 = arith.constant 0 : i32
    %c0_i32_1 = arith.constant 0 : i32
    return %arg0, %c0_i32, %c0_i32_0 : i32, i32, i32
  }
}

</mosaic_0001>

<llo_original>
// kernel: gcn_gru_forward.1
$region0: #{gcn_gru_forward.1}
  #allocation0 [shape = 'u32[]', space=smem, size = 0x4, offset = 0x4, fixed_abs, tag = 'smem constant byte address 0x4 - core index']
  #allocation1 [shape = 'u32[144,128]{1,0:T(1,128)}', space=vmem, size = 0x12000, scoped, tag = 'internal scratch']
  %s0 = inlined_call_operand.vmem [shape: f32[1,16,8], index: 0, kind: input, shape index: {}]
  %s1 = inlined_call_operand.vmem [shape: f32[1,16,16], index: 1, kind: input, shape index: {}]
  %s2 = inlined_call_operand.vmem [shape: f32[8,96], index: 2, kind: input, shape index: {}]
  %s3 = inlined_call_operand.vmem [shape: f32[4,96], index: 3, kind: input, shape index: {}]
  %s4 = inlined_call_operand.vmem [shape: f32[1,16,1], index: 4, kind: output, shape index: {}]
  %s5 = sld [smem:[#allocation0]]
  $region26: #{gcn_gru_forward.1} parent=0
    _
  %s7 = ssub.s32 1, %s5
  %s8 = scalar_select 0, %s7, %s5
  // Predicated region
  $region2: #{gcn_gru_forward.1} parent=0 // pred_check
    _
  $region3: #{gcn_gru_forward.1} parent=0 // pred_check_branch
    %10 = sbr.rel (0) target = $region5
  $region4: #{gcn_gru_forward.1} parent=0 // pred_region
    _
  $region5: #{gcn_gru_forward.1} parent=0 // pred_fallthru
    _
  // Predicated region
  $region6: #{gcn_gru_forward.1} parent=0 // pred_check
    _
  $region7: #{gcn_gru_forward.1} parent=0 // pred_check_branch
    %12 = sbr.rel (0) target = $region9
  $region8: #{gcn_gru_forward.1} parent=0 // pred_region
    _
  $region9: #{gcn_gru_forward.1} parent=0 // pred_fallthru
    _
  // Predicated region
  $region10: #{gcn_gru_forward.1} parent=0 // pred_check
    _
  $region11: #{gcn_gru_forward.1} parent=0 // pred_check_branch
    %14 = sbr.rel (0) target = $region13
  $region12: #{gcn_gru_forward.1} parent=0 // pred_region
    _
  $region13: #{gcn_gru_forward.1} parent=0 // pred_fallthru
    _
  // Predicated region
  $region14: #{gcn_gru_forward.1} parent=0 // pred_check
    _
  $region15: #{gcn_gru_forward.1} parent=0 // pred_check_branch
    %16 = sbr.rel (0) target = $region17
  $region16: #{gcn_gru_forward.1} parent=0 // pred_region
    _
  $region17: #{gcn_gru_forward.1} parent=0 // pred_fallthru
    _
  %v17 = vld [vmem:[%s0] sm:$0xff]
  %v18 = vld [vmem:[%s0 + $0x8] sm:$0xff]
  %v19 = vld [vmem:[%s2] sm:$0xff]
  %vm20 = vcmask 64512
  %v22 = vsel %vm20, %v17, 0
  %v25 = vsel %vm20, %v18, 0
  %27 = vmatprep.subr.mxu0 0.0
  %28 = vmatpush1.msra.mxu0 %v19
  %29 = vmatprep.subr.mxu0 0.0
  %30 = vmatpush1.msra.mxu0 0.0
  %31 = vmatprep.subr.mxu0 0.0
  %32 = vmatpush1.msra.mxu0 0.0
  %33 = vmatprep.subr.mxu0 0.0
  %34 = vmatpush1.msra.mxu0 0.0
  %35 = vmatprep.subr.mxu0 0.0
  %36 = vmatpush1.msra.mxu0 0.0
  %37 = vmatprep.subr.mxu0 0.0
  %38 = vmatpush1.msra.mxu0 0.0
  %39 = vmatprep.subr.mxu0 0.0
  %40 = vmatpush1.msra.mxu0 0.0
  %41 = vmatprep.subr.mxu0 0.0
  %42 = vmatpush1.msra.mxu0 0.0
  %43 = vmatprep.subr.mxu0 0.0
  %44 = vmatpush1.msra.mxu0 0.0
  %45 = vmatprep.subr.mxu0 0.0
  %46 = vmatpush1.msra.mxu0 0.0
  %47 = vmatprep.subr.mxu0 0.0
  %48 = vmatpush1.msra.mxu0 0.0
  %49 = vmatprep.subr.mxu0 0.0
  %50 = vmatpush1.msra.mxu0 0.0
  %51 = vmatprep.subr.mxu0 0.0
  %52 = vmatpush1.msra.mxu0 0.0
  %53 = vmatprep.subr.mxu0 0.0
  %54 = vmatpush1.msra.mxu0 0.0
  %55 = vmatprep.subr.mxu0 0.0
  %56 = vmatpush1.msra.mxu0 0.0
  %57 = vmatprep.subr.mxu0 0.0
  %58 = vmatpush1.msra.mxu0 0.0
  %59 = vmatprep.subr.mxu0 0.0
  %60 = vmatpush1.msra.mxu0 0.0
  %61 = vmatprep.subr.mxu0 0.0
  %62 = vmatpush1.msra.mxu0 0.0
  %63 = vmatprep.subr.mxu0 0.0
  %64 = vmatpush1.msra.mxu0 0.0
  %65 = vmatprep.subr.mxu0 0.0
  %66 = vmatpush1.msra.mxu0 0.0
  %67 = vmatprep.subr.mxu0 0.0
  %68 = vmatpush1.msra.mxu0 0.0
  %69 = vmatprep.subr.mxu0 0.0
  %70 = vmatpush1.msra.mxu0 0.0
  %71 = vmatprep.subr.mxu0 0.0
  %72 = vmatpush1.msra.mxu0 0.0
  %73 = vmatprep.subr.mxu0 0.0
  %74 = vmatpush1.msra.mxu0 0.0
  %75 = vmatprep.subr.mxu0 0.0
  %76 = vmatpush1.msra.mxu0 0.0
  %77 = vmatprep.subr.mxu0 0.0
  %78 = vmatpush1.msra.mxu0 0.0
  %79 = vmatprep.subr.mxu0 0.0
  %80 = vmatpush1.msra.mxu0 0.0
  %81 = vmatprep.subr.mxu0 0.0
  %82 = vmatpush1.msra.mxu0 0.0
  %83 = vmatprep.subr.mxu0 0.0
  %84 = vmatpush1.msra.mxu0 0.0
  %85 = vmatprep.subr.mxu0 0.0
  %86 = vmatpush1.msra.mxu0 0.0
  %87 = vmatprep.subr.mxu0 0.0
  %88 = vmatpush1.msra.mxu0 0.0
  %89 = vmatprep.subr.mxu0 0.0
  %90 = vmatpush1.msra.mxu0 0.0
  %91 = vmatprep.mubr.f32.mxu0 0.0
  %92 = vmatmul.mubr.f32.gmra.mrb[0].mxu0 %v22
  %v93 = vpop.f32.mrb[0].mxu0
  %v94 = vadd.f32 0.0, %v93
  %v95 = vpop.f32.mrb[0].mxu0
  %96 = vmatprep.mubr.f32.mxu0 0.0
  %97 = vmatmul.mubr.f32.gmra.mrb[0].mxu0 %v25
  %v98 = vpop.f32.mrb[0].mxu0
  %v99 = vadd.f32 0.0, %v98
  %v100 = vpop.f32.mrb[0].mxu0
  %101 = vdwg.mxu0
  %v102 = vld [vmem:[%s1] sm:$0xff]
  %v103 = vld [vmem:[%s1 + $0x8] sm:$0xff]
  %v104 = vld [vmem:[%s3] sm:$0x1]
  %v105 = vlaneseq
  %v106 = vshrl.u32 %v105, 7
  %v107 = vsub.s32 0, %v106
  %v108 = vrot.slane %v104, %v107
  %vm109 = vcmask 130048
  %v111 = vsel %vm109, %v102, 0
  %v114 = vsel %vm109, %v103, 0
  %116 = vmatprep.subr.mxu0 0.0
  %117 = vmatpush1.msra.mxu0 %v94
  %118 = vmatprep.subr.mxu0 0.0
  %119 = vmatpush1.msra.mxu0 %v99
  %120 = vmatprep.subr.mxu0 0.0
  %121 = vmatpush1.msra.mxu0 0.0
  %122 = vmatprep.subr.mxu0 0.0
  %123 = vmatpush1.msra.mxu0 0.0
  %124 = vmatprep.subr.mxu0 0.0
  %125 = vmatpush1.msra.mxu0 0.0
  %126 = vmatprep.subr.mxu0 0.0
  %127 = vmatpush1.msra.mxu0 0.0
  %128 = vmatprep.subr.mxu0 0.0
  %129 = vmatpush1.msra.mxu0 0.0
  %130 = vmatprep.subr.mxu0 0.0
  %131 = vmatpush1.msra.mxu0 0.0
  %132 = vmatprep.subr.mxu0 0.0
  %133 = vmatpush1.msra.mxu0 0.0
  %134 = vmatprep.subr.mxu0 0.0
  %135 = vmatpush1.msra.mxu0 0.0
  %136 = vmatprep.subr.mxu0 0.0
  %137 = vmatpush1.msra.mxu0 0.0
  %138 = vmatprep.subr.mxu0 0.0
  %139 = vmatpush1.msra.mxu0 0.0
  %140 = vmatprep.subr.mxu0 0.0
  %141 = vmatpush1.msra.mxu0 0.0
  %142 = vmatprep.subr.mxu0 0.0
  %143 = vmatpush1.msra.mxu0 0.0
  %144 = vmatprep.subr.mxu0 0.0
  %145 = vmatpush1.msra.mxu0 0.0
  %146 = vmatprep.subr.mxu0 0.0
  %147 = vmatpush1.msra.mxu0 0.0
  %148 = vmatprep.subr.mxu0 0.0
  %149 = vmatpush1.msra.mxu0 0.0
  %150 = vmatprep.subr.mxu0 0.0
  %151 = vmatpush1.msra.mxu0 0.0
  %152 = vmatprep.subr.mxu0 0.0
  %153 = vmatpush1.msra.mxu0 0.0
  %154 = vmatprep.subr.mxu0 0.0
  %155 = vmatpush1.msra.mxu0 0.0
  %156 = vmatprep.subr.mxu0 0.0
  %157 = vmatpush1.msra.mxu0 0.0
  %158 = vmatprep.subr.mxu0 0.0
  %159 = vmatpush1.msra.mxu0 0.0
  %160 = vmatprep.subr.mxu0 0.0
  %161 = vmatpush1.msra.mxu0 0.0
  %162 = vmatprep.subr.mxu0 0.0
  %163 = vmatpush1.msra.mxu0 0.0
  %164 = vmatprep.subr.mxu0 0.0
  %165 = vmatpush1.msra.mxu0 0.0
  %166 = vmatprep.subr.mxu0 0.0
  %167 = vmatpush1.msra.mxu0 0.0
  %168 = vmatprep.subr.mxu0 0.0
  %169 = vmatpush1.msra.mxu0 0.0
  %170 = vmatprep.subr.mxu0 0.0
  %171 = vmatpush1.msra.mxu0 0.0
  %172 = vmatprep.subr.mxu0 0.0
  %173 = vmatpush1.msra.mxu0 0.0
  %174 = vmatprep.subr.mxu0 0.0
  %175 = vmatpush1.msra.mxu0 0.0
  %176 = vmatprep.subr.mxu0 0.0
  %177 = vmatpush1.msra.mxu0 0.0
  %178 = vmatprep.subr.mxu0 0.0
  %179 = vmatpush1.msra.mxu0 0.0
  %180 = vmatprep.mubr.f32.mxu0 0.0
  %181 = vmatmul.mubr.f32.gmra.mrb[0].mxu0 %v111
  %v182 = vpop.f32.mrb[0].mxu0
  %v183 = vadd.f32 %v108, %v182
  %v184 = vpop.f32.mrb[0].mxu0
  %185 = vmatprep.mubr.f32.mxu0 0.0
  %186 = vmatmul.mubr.f32.gmra.mrb[0].mxu0 %v114
  %v187 = vpop.f32.mrb[0].mxu0
  %v188 = vadd.f32 %v108, %v187
  %v189 = vpop.f32.mrb[0].mxu0
  %190 = vdwg.mxu0
  %v191 = vld [vmem:[%s3 + $0x1] sm:$0x1]
  %v192 = vlaneseq
  %v193 = vshrl.u32 %v192, 7
  %v194 = vsub.s32 0, %v193
  %v195 = vrot.slane %v191, %v194
  %v196 = vadd.f32 %v183, %v195
  %v197 = vadd.f32 %v188, %v195
  %v198 = vxor.u32 %v196, 2147483648
  %v199 = vxor.u32 %v197, 2147483648
  %v200 = vmul.f32 %v198, 1.442695
  %v201 = vpow.pop %v200
  %v202 = vmul.f32 %v199, 1.442695
  %v203 = vpow.pop %v202
  %v204 = vadd.f32 %v201, 1.0
  %v205 = vadd.f32 %v203, 1.0
  %v206 = vrcp.pop %v204
  %v207 = vmul.f32 1.0, %v206
  %v208 = vrcp.pop %v205
  %v209 = vmul.f32 1.0, %v208
  %211 = vrot.lane.b32.xlu0 %v195, 64
  %v212 = vpop.permute.xlu0 %211
  %v214 = vmul.f32 %v207, %v212
  %v215 = vmul.f32 %v209, %v212
  %218 = vrot.lane.b32.xlu0 %v214, 64
  %v219 = vpop.permute.xlu0 %218
  %220 = vrot.lane.b32.xlu0 %v215, 64
  %v221 = vpop.permute.xlu0 %220
  %v224 = vadd.f32 %v183, %v219
  %v225 = vadd.f32 %v188, %v221
  %v226 = vtanh.pop %v224
  %v227 = vtanh.pop %v225
  %v228 = vsub.f32 1.0, %v207
  %v229 = vsub.f32 1.0, %v209
  %232 = vrot.lane.b32.xlu0 %v226, 96
  %v233 = vpop.permute.xlu0 %232
  %234 = vrot.lane.b32.xlu0 %v227, 96
  %v235 = vpop.permute.xlu0 %234
  %v238 = vmul.f32 %v228, %v233
  %v239 = vmul.f32 %v229, %v235
  %v240 = vld [vmem:[%s3 + $0x2] sm:$0x1]
  %v241 = vld [vmem:[%s3 + $0x3] sm:$0x1]
  %v242 = vlaneseq
  %v243 = vshrl.u32 %v242, 7
  %v244 = vsub.s32 0, %v243
  %v245 = vrot.slane %v240, %v244
  %247 = vrot.lane.b32.xlu0 %v245, 32
  %v248 = vpop.permute.xlu0 %247
  %v250 = vmul.f32 %v238, %v248
  %v251 = vmul.f32 %v239, %v248
  %254 = vrot.lane.b32.xlu0 %v250, 96
  %v255 = vpop.permute.xlu0 %254
  %256 = vrot.lane.b32.xlu0 %v251, 96
  %v257 = vpop.permute.xlu0 %256
  %vm260 = vcmask 261120
  %v261 = vsel %vm260, %v255, 0.0
  %262 = vadd.xlane.f32.xlu0 %v261
  %v263 = vpop.xlane.xlu0 %262
  %v264 = vsel %vm260, %v257, 0.0
  %265 = vadd.xlane.f32.xlu0 %v264
  %v266 = vpop.xlane.xlu0 %265
  %v267 = vlaneseq
  %v268 = vshrl.u32 %v267, 7
  %v269 = vsub.s32 0, %v268
  %v270 = vrot.slane %v241, %v269
  %v271 = vadd.f32 %v263, %v270
  %v272 = vadd.f32 %v266, %v270
  %vm273 = vcmask 7168
  %274 = vst.msk [vmem:[%s4] sm:$0xff] %vm273, %v271
  %275 = vst.msk [vmem:[%s4 + $0x8] sm:$0xff] %vm273, %v272
  // Predicated region
  $region18: #{gcn_gru_forward.1} parent=0 // pred_check
    _
  $region19: #{gcn_gru_forward.1} parent=0 // pred_check_branch
    %277 = sbr.rel (0) target = $region21
  $region20: #{gcn_gru_forward.1} parent=0 // pred_region
    _
  $region21: #{gcn_gru_forward.1} parent=0 // pred_fallthru
    _
  // Predicated region
  $region22: #{gcn_gru_forward.1} parent=0 // pred_check
    _
  $region23: #{gcn_gru_forward.1} parent=0 // pred_check_branch
    %279 = sbr.rel (0) target = $region25
  $region24: #{gcn_gru_forward.1} parent=0 // pred_region
    _
  $region25: #{gcn_gru_forward.1} parent=0 // pred_fallthru
    _

</llo_original>
